<compile_context>
chip_gen: v7x
topology: tpu7x:2x2x1
jax: 0.10.0
libtpu: 0.0.40
codegen_flags: <defaults>
</compile_context>

<pallas_src>
import jax
import jax.numpy as jnp
from jax.experimental import pallas as pl
from jax.experimental.pallas import tpu as pltpu  # noqa: F401  (TPU backend)

# Model dims (match the PyTorch module: GRU hidden=64, fc1: 64->32, fc2: 32->2)
VOCAB = 50
EMBED = 32          # embedding_dim (module takes it from the dataset embedding)
HIDDEN = 64
FC1 = 32
NUM_CLASSES = 2
LANE = 128          # lane-dense padded width for the fc1 / fc2 tails
SUBLANE = 8         # pad batch to at least this many rows


def gru_classifier_kernel(gi_ref,     # [T, Bp, 3H] f32  fused gate inputs (r|z|n); b_ih + b_hh_{r,z} folded
                          whh_ref,    # [H, 3H]     bf16 fused recurrent weights (r|z|n)
                          bhh_n_ref,  # [1, H]      f32  (stays inside: multiplied by r)
                          w1_ref,     # [H, LANE]   bf16 (fc1 out padded 32 -> 128)
                          b1_ref,     # [1, LANE]   f32
                          w2_ref,     # [LANE, LANE] bf16 (fc2 padded [32,2] -> [128,128])
                          b2_ref,     # [1, LANE]   f32
                          out_ref):   # [Bp, LANE]  f32
    T, B, G = gi_ref.shape
    H = G // 3

    whh = whh_ref[...]                                        # [H, 3H] bf16, loaded once
    # Hoist the bias broadcast out of the unrolled loop (JAX doesn't CSE it).
    bhh_n_b = jnp.broadcast_to(bhh_n_ref[...], (B, H))        # [B, H]

    # t = 0: h0 == 0, so the recurrent matmul vanishes.
    g0 = gi_ref[0]                                            # [B, 3H]
    rz = jax.nn.sigmoid(g0[:, :2 * H])                        # one EUP pass, full 128-lane vreg
    r = rz[:, :H]
    z = rz[:, H:]
    n = jnp.tanh(g0[:, 2 * H:] + r * bhh_n_b)
    h = (1.0 - z) * n                                         # [B, H] f32

    # Statically unrolled recurrence: ONE fused [B,H] x [H,3H] dot per step.
    for t in range(1, T):
        gh = jnp.dot(h.astype(whh.dtype), whh,
                     preferred_element_type=jnp.float32)      # [B, 3H]
        gt = gi_ref[t]                                        # [B, 3H]
        rz = jax.nn.sigmoid(gt[:, :2 * H] + gh[:, :2 * H])    # fused r|z sigmoid
        r = rz[:, :H]
        z = rz[:, H:]
        n = jnp.tanh(gt[:, 2 * H:] + r * (gh[:, 2 * H:] + bhh_n_b))
        h = (1.0 - z) * n + z * h

    # fc1 -> ReLU -> fc2, both lane-padded to 128 (dense vregs, unmasked store).
    h1 = jnp.maximum(
        jnp.dot(h.astype(w1_ref.dtype), w1_ref[...],
                preferred_element_type=jnp.float32) + b1_ref[...],
        0.0,
    )                                                         # [B, LANE]
    logits = jnp.dot(h1.astype(w2_ref.dtype), w2_ref[...],
                     preferred_element_type=jnp.float32) + b2_ref[...]
    out_ref[...] = logits.astype(out_ref.dtype)


def _full_spec(shape):
    nd = len(shape)
    return pl.BlockSpec(shape, lambda *_, _nd=nd: (0,) * _nd)


def prepare_params(params):
    """One-time fold / pad / cast of weights into kernel-ready form."""
    H = HIDDEN
    emb = params["embedding"]            # [V, E]
    w_ih = params["w_ih"]                # [E, 3H]  gate order (r|z|n)
    b_ih = params["b_ih"]                # [1, 3H]
    b_hh = params["b_hh"]                # [1, 3H]

    # Fold embedding @ W_ih + b_ih (+ the r/z halves of b_hh) into ONE fused
    # [VOCAB, 3H] table -> per-token gi is a single gather, no per-step matmul.
    table = jnp.dot(emb, w_ih) + b_ih                         # [V, 3H]
    table = table.at[:, :2 * H].add(b_hh[:, :2 * H])
    bhh_n = b_hh[:, 2 * H:]                                   # [1, H] stays in the kernel

    whh = params["w_hh"].astype(jnp.bfloat16)                 # [H, 3H] fused recurrent weights

    w1p = (jnp.zeros((H, LANE), jnp.float32)
           .at[:, :FC1].set(params["w_fc1"])).astype(jnp.bfloat16)
    b1p = jnp.zeros((1, LANE), jnp.float32).at[:, :FC1].set(params["b_fc1"])
    w2p = (jnp.zeros((LANE, LANE), jnp.float32)
           .at[:FC1, :NUM_CLASSES].set(params["w_fc2"])).astype(jnp.bfloat16)
    b2p = jnp.zeros((1, LANE), jnp.float32).at[:, :NUM_CLASSES].set(params["b_fc2"])

    return {"gi_table": table, "whh": whh, "bhh_n": bhh_n,
            "w1": w1p, "b1": b1p, "w2": w2p, "b2": b2p}


@jax.jit
def gru_classifier_forward(x_tokens, prep):
    """x_tokens: int32 [B, T] token ids. Returns logits [B, NUM_CLASSES]."""
    B, T = x_tokens.shape
    B_PAD = max(SUBLANE, ((B + SUBLANE - 1) // SUBLANE) * SUBLANE)

    # Time-major token ids, batch padded to sublane width (pad token id 0;
    # padded rows are discarded when slicing the output).
    tok_tm = jnp.transpose(x_tokens)                          # [T, B]
    tok_tm = jnp.pad(tok_tm, ((0, 0), (0, B_PAD - B)))        # [T, Bp]
    gi = jnp.take(prep["gi_table"], tok_tm, axis=0)           # [T, Bp, 3H] single gather

    ins = (gi, prep["whh"], prep["bhh_n"], prep["w1"], prep["b1"],
           prep["w2"], prep["b2"])
    out_padded = pl.pallas_call(
        gru_classifier_kernel,
        out_shape=jax.ShapeDtypeStruct((B_PAD, LANE), jnp.float32),
        in_specs=[_full_spec(a.shape) for a in ins],
        out_specs=_full_spec((B_PAD, LANE)),
    )(*ins)
    return out_padded[:B, :NUM_CLASSES]


def reference_forward(x_tokens, params):
    """Pure-JAX f32 reference of the PyTorch forward (GRU + fc1/ReLU/fc2)."""
    H = HIDDEN
    emb = params["embedding"][x_tokens]                       # [B, T, E]
    w_ih, w_hh = params["w_ih"], params["w_hh"]
    b_ih, b_hh = params["b_ih"][0], params["b_hh"][0]
    B, T, _ = emb.shape
    h = jnp.zeros((B, H), jnp.float32)
    for t in range(T):
        gi = emb[:, t, :] @ w_ih + b_ih
        gh = h @ w_hh + b_hh
        r = jax.nn.sigmoid(gi[:, :H] + gh[:, :H])
        z = jax.nn.sigmoid(gi[:, H:2 * H] + gh[:, H:2 * H])
        n = jnp.tanh(gi[:, 2 * H:] + r * gh[:, 2 * H:])
        h = (1.0 - z) * n + z * h
    h1 = jnp.maximum(h @ params["w_fc1"] + params["b_fc1"], 0.0)
    return h1 @ params["w_fc2"] + params["b_fc2"]


def init_params(key):
    ks = jax.random.split(key, 9)
    s_gru = 1.0 / jnp.sqrt(HIDDEN)
    s_fc1 = 1.0 / jnp.sqrt(HIDDEN)
    s_fc2 = 1.0 / jnp.sqrt(FC1)
    u = lambda k, shape, s: jax.random.uniform(k, shape, jnp.float32, -s, s)
    return {
        "embedding": jax.random.normal(ks[0], (VOCAB, EMBED), jnp.float32),
        # GRU weights stored transposed vs PyTorch: [in, 3H], gate order (r|z|n)
        "w_ih": u(ks[1], (EMBED, 3 * HIDDEN), s_gru),
        "w_hh": u(ks[2], (HIDDEN, 3 * HIDDEN), s_gru),
        "b_ih": u(ks[3], (1, 3 * HIDDEN), s_gru),
        "b_hh": u(ks[4], (1, 3 * HIDDEN), s_gru),
        "w_fc1": u(ks[5], (HIDDEN, FC1), s_fc1),
        "b_fc1": u(ks[6], (1, FC1), s_fc1),
        "w_fc2": u(ks[7], (FC1, NUM_CLASSES), s_fc2),
        "b_fc2": u(ks[8], (1, NUM_CLASSES), s_fc2),
    }


if __name__ == "__main__":
    key = jax.random.PRNGKey(0)
    pkey, xkey = jax.random.split(key)
    params = init_params(pkey)
    prep = prepare_params(params)            # one-time weight fold / pad / cast

    B, T = 2, 8
    x_tokens = jax.random.randint(xkey, (B, T), 0, VOCAB, dtype=jnp.int32)

    logits = gru_classifier_forward(x_tokens, prep)
    logits = jax.block_until_ready(logits)
    assert logits.shape == (B, NUM_CLASSES)
    assert bool(jnp.all(jnp.isfinite(logits)))

    # Validate against the f32 pure-JAX reference (bf16 recurrent weights
    # introduce small rounding differences).
    ref = reference_forward(x_tokens, params)
    assert bool(jnp.all(jnp.abs(logits - ref) < 5e-2))

    print("KERNEL_OK")
</pallas_src>

<mosaic_0001>
module attributes {stable_mosaic.version = 11 : i64} {
  func.func @gru_classifier_kernel(%arg0: memref<8x8x192xf32, #tpu.memory_space<vmem>>, %arg1: memref<64x192xbf16, #tpu.memory_space<vmem>>, %arg2: memref<1x64xf32, #tpu.memory_space<vmem>>, %arg3: memref<64x128xbf16, #tpu.memory_space<vmem>>, %arg4: memref<1x128xf32, #tpu.memory_space<vmem>>, %arg5: memref<128x128xbf16, #tpu.memory_space<vmem>>, %arg6: memref<1x128xf32, #tpu.memory_space<vmem>>, %arg7: memref<8x128xf32, #tpu.memory_space<vmem>>) attributes {dimension_semantics = [], scalar_prefetch = 0 : i64, scratch_operands = 0 : i64, tpu.core_type = #tpu.core_type<tc>} {
    %c0 = arith.constant 0 : index
    %c0_0 = arith.constant 0 : index
    %0 = vector.load %arg1[%c0, %c0_0] : memref<64x192xbf16, #tpu.memory_space<vmem>>, vector<64x192xbf16>
    %c0_1 = arith.constant 0 : index
    %c0_2 = arith.constant 0 : index
    %1 = vector.load %arg2[%c0_1, %c0_2] : memref<1x64xf32, #tpu.memory_space<vmem>>, vector<1x64xf32>
    %2 = vector.shape_cast %1 : vector<1x64xf32> to vector<1x64xf32>
    %3 = vector.broadcast %2 : vector<1x64xf32> to vector<8x64xf32>
    %c0_3 = arith.constant 0 : index
    %c0_4 = arith.constant 0 : index
    %c0_5 = arith.constant 0 : index
    %4 = vector.load %arg0[%c0_3, %c0_4, %c0_5] : memref<8x8x192xf32, #tpu.memory_space<vmem>>, vector<1x8x192xf32>
    %5 = vector.shape_cast %4 : vector<1x8x192xf32> to vector<8x192xf32>
    %6 = vector.extract_strided_slice %5 {offsets = [0, 0], sizes = [8, 128], strides = [1, 1]} : vector<8x192xf32> to vector<8x128xf32>
    %7 = arith.negf %6 : vector<8x128xf32>
    %8 = math.exp %7 : vector<8x128xf32>
    %cst = arith.constant 1.000000e+00 : f32
    %9 = vector.broadcast %cst : f32 to vector<8x128xf32>
    %10 = arith.addf %9, %8 : vector<8x128xf32>
    %11 = arith.divf %9, %10 : vector<8x128xf32>
    %12 = vector.extract_strided_slice %11 {offsets = [0, 0], sizes = [8, 64], strides = [1, 1]} : vector<8x128xf32> to vector<8x64xf32>
    %13 = vector.extract_strided_slice %11 {offsets = [0, 64], sizes = [8, 64], strides = [1, 1]} : vector<8x128xf32> to vector<8x64xf32>
    %14 = vector.extract_strided_slice %5 {offsets = [0, 128], sizes = [8, 64], strides = [1, 1]} : vector<8x192xf32> to vector<8x64xf32>
    %15 = arith.mulf %12, %3 : vector<8x64xf32>
    %16 = arith.addf %14, %15 : vector<8x64xf32>
    %17 = math.tanh %16 : vector<8x64xf32>
    %cst_6 = arith.constant 1.000000e+00 : f32
    %18 = vector.broadcast %cst_6 : f32 to vector<8x64xf32>
    %19 = arith.subf %18, %13 : vector<8x64xf32>
    %20 = arith.mulf %19, %17 : vector<8x64xf32>
    %21 = arith.truncf %20 : vector<8x64xf32> to vector<8x64xbf16>
    %cst_7 = arith.constant dense<0.000000e+00> : vector<8x192xf32>
    %22 = tpu.matmul %21, %0, %cst_7 {dimension_numbers = #tpu.dot_dimension_numbers<[1], [0], [0], [1], [0, 0, 1, 1], [], []>} : vector<8x64xbf16>, vector<64x192xbf16>, vector<8x192xf32> -> vector<8x192xf32>
    %c1 = arith.constant 1 : index
    %c0_8 = arith.constant 0 : index
    %c0_9 = arith.constant 0 : index
    %23 = vector.load %arg0[%c1, %c0_8, %c0_9] : memref<8x8x192xf32, #tpu.memory_space<vmem>>, vector<1x8x192xf32>
    %24 = vector.shape_cast %23 : vector<1x8x192xf32> to vector<8x192xf32>
    %25 = vector.extract_strided_slice %24 {offsets = [0, 0], sizes = [8, 128], strides = [1, 1]} : vector<8x192xf32> to vector<8x128xf32>
    %26 = vector.extract_strided_slice %22 {offsets = [0, 0], sizes = [8, 128], strides = [1, 1]} : vector<8x192xf32> to vector<8x128xf32>
    %27 = arith.addf %25, %26 : vector<8x128xf32>
    %28 = arith.negf %27 : vector<8x128xf32>
    %29 = math.exp %28 : vector<8x128xf32>
    %cst_10 = arith.constant 1.000000e+00 : f32
    %30 = vector.broadcast %cst_10 : f32 to vector<8x128xf32>
    %31 = arith.addf %30, %29 : vector<8x128xf32>
    %32 = arith.divf %30, %31 : vector<8x128xf32>
    %33 = vector.extract_strided_slice %32 {offsets = [0, 0], sizes = [8, 64], strides = [1, 1]} : vector<8x128xf32> to vector<8x64xf32>
    %34 = vector.extract_strided_slice %32 {offsets = [0, 64], sizes = [8, 64], strides = [1, 1]} : vector<8x128xf32> to vector<8x64xf32>
    %35 = vector.extract_strided_slice %24 {offsets = [0, 128], sizes = [8, 64], strides = [1, 1]} : vector<8x192xf32> to vector<8x64xf32>
    %36 = vector.extract_strided_slice %22 {offsets = [0, 128], sizes = [8, 64], strides = [1, 1]} : vector<8x192xf32> to vector<8x64xf32>
    %37 = arith.addf %36, %3 : vector<8x64xf32>
    %38 = arith.mulf %33, %37 : vector<8x64xf32>
    %39 = arith.addf %35, %38 : vector<8x64xf32>
    %40 = math.tanh %39 : vector<8x64xf32>
    %cst_11 = arith.constant 1.000000e+00 : f32
    %41 = vector.broadcast %cst_11 : f32 to vector<8x64xf32>
    %42 = arith.subf %41, %34 : vector<8x64xf32>
    %43 = arith.mulf %42, %40 : vector<8x64xf32>
    %44 = arith.mulf %34, %20 : vector<8x64xf32>
    %45 = arith.addf %43, %44 : vector<8x64xf32>
    %46 = arith.truncf %45 : vector<8x64xf32> to vector<8x64xbf16>
    %cst_12 = arith.constant dense<0.000000e+00> : vector<8x192xf32>
    %47 = tpu.matmul %46, %0, %cst_12 {dimension_numbers = #tpu.dot_dimension_numbers<[1], [0], [0], [1], [0, 0, 1, 1], [], []>} : vector<8x64xbf16>, vector<64x192xbf16>, vector<8x192xf32> -> vector<8x192xf32>
    %c2 = arith.constant 2 : index
    %c0_13 = arith.constant 0 : index
    %c0_14 = arith.constant 0 : index
    %48 = vector.load %arg0[%c2, %c0_13, %c0_14] : memref<8x8x192xf32, #tpu.memory_space<vmem>>, vector<1x8x192xf32>
    %49 = vector.shape_cast %48 : vector<1x8x192xf32> to vector<8x192xf32>
    %50 = vector.extract_strided_slice %49 {offsets = [0, 0], sizes = [8, 128], strides = [1, 1]} : vector<8x192xf32> to vector<8x128xf32>
    %51 = vector.extract_strided_slice %47 {offsets = [0, 0], sizes = [8, 128], strides = [1, 1]} : vector<8x192xf32> to vector<8x128xf32>
    %52 = arith.addf %50, %51 : vector<8x128xf32>
    %53 = arith.negf %52 : vector<8x128xf32>
    %54 = math.exp %53 : vector<8x128xf32>
    %cst_15 = arith.constant 1.000000e+00 : f32
    %55 = vector.broadcast %cst_15 : f32 to vector<8x128xf32>
    %56 = arith.addf %55, %54 : vector<8x128xf32>
    %57 = arith.divf %55, %56 : vector<8x128xf32>
    %58 = vector.extract_strided_slice %57 {offsets = [0, 0], sizes = [8, 64], strides = [1, 1]} : vector<8x128xf32> to vector<8x64xf32>
    %59 = vector.extract_strided_slice %57 {offsets = [0, 64], sizes = [8, 64], strides = [1, 1]} : vector<8x128xf32> to vector<8x64xf32>
    %60 = vector.extract_strided_slice %49 {offsets = [0, 128], sizes = [8, 64], strides = [1, 1]} : vector<8x192xf32> to vector<8x64xf32>
    %61 = vector.extract_strided_slice %47 {offsets = [0, 128], sizes = [8, 64], strides = [1, 1]} : vector<8x192xf32> to vector<8x64xf32>
    %62 = arith.addf %61, %3 : vector<8x64xf32>
    %63 = arith.mulf %58, %62 : vector<8x64xf32>
    %64 = arith.addf %60, %63 : vector<8x64xf32>
    %65 = math.tanh %64 : vector<8x64xf32>
    %cst_16 = arith.constant 1.000000e+00 : f32
    %66 = vector.broadcast %cst_16 : f32 to vector<8x64xf32>
    %67 = arith.subf %66, %59 : vector<8x64xf32>
    %68 = arith.mulf %67, %65 : vector<8x64xf32>
    %69 = arith.mulf %59, %45 : vector<8x64xf32>
    %70 = arith.addf %68, %69 : vector<8x64xf32>
    %71 = arith.truncf %70 : vector<8x64xf32> to vector<8x64xbf16>
    %cst_17 = arith.constant dense<0.000000e+00> : vector<8x192xf32>
    %72 = tpu.matmul %71, %0, %cst_17 {dimension_numbers = #tpu.dot_dimension_numbers<[1], [0], [0], [1], [0, 0, 1, 1], [], []>} : vector<8x64xbf16>, vector<64x192xbf16>, vector<8x192xf32> -> vector<8x192xf32>
    %c3 = arith.constant 3 : index
    %c0_18 = arith.constant 0 : index
    %c0_19 = arith.constant 0 : index
    %73 = vector.load %arg0[%c3, %c0_18, %c0_19] : memref<8x8x192xf32, #tpu.memory_space<vmem>>, vector<1x8x192xf32>
    %74 = vector.shape_cast %73 : vector<1x8x192xf32> to vector<8x192xf32>
    %75 = vector.extract_strided_slice %74 {offsets = [0, 0], sizes = [8, 128], strides = [1, 1]} : vector<8x192xf32> to vector<8x128xf32>
    %76 = vector.extract_strided_slice %72 {offsets = [0, 0], sizes = [8, 128], strides = [1, 1]} : vector<8x192xf32> to vector<8x128xf32>
    %77 = arith.addf %75, %76 : vector<8x128xf32>
    %78 = arith.negf %77 : vector<8x128xf32>
    %79 = math.exp %78 : vector<8x128xf32>
    %cst_20 = arith.constant 1.000000e+00 : f32
    %80 = vector.broadcast %cst_20 : f32 to vector<8x128xf32>
    %81 = arith.addf %80, %79 : vector<8x128xf32>
    %82 = arith.divf %80, %81 : vector<8x128xf32>
    %83 = vector.extract_strided_slice %82 {offsets = [0, 0], sizes = [8, 64], strides = [1, 1]} : vector<8x128xf32> to vector<8x64xf32>
    %84 = vector.extract_strided_slice %82 {offsets = [0, 64], sizes = [8, 64], strides = [1, 1]} : vector<8x128xf32> to vector<8x64xf32>
    %85 = vector.extract_strided_slice %74 {offsets = [0, 128], sizes = [8, 64], strides = [1, 1]} : vector<8x192xf32> to vector<8x64xf32>
    %86 = vector.extract_strided_slice %72 {offsets = [0, 128], sizes = [8, 64], strides = [1, 1]} : vector<8x192xf32> to vector<8x64xf32>
    %87 = arith.addf %86, %3 : vector<8x64xf32>
    %88 = arith.mulf %83, %87 : vector<8x64xf32>
    %89 = arith.addf %85, %88 : vector<8x64xf32>
    %90 = math.tanh %89 : vector<8x64xf32>
    %cst_21 = arith.constant 1.000000e+00 : f32
    %91 = vector.broadcast %cst_21 : f32 to vector<8x64xf32>
    %92 = arith.subf %91, %84 : vector<8x64xf32>
    %93 = arith.mulf %92, %90 : vector<8x64xf32>
    %94 = arith.mulf %84, %70 : vector<8x64xf32>
    %95 = arith.addf %93, %94 : vector<8x64xf32>
    %96 = arith.truncf %95 : vector<8x64xf32> to vector<8x64xbf16>
    %cst_22 = arith.constant dense<0.000000e+00> : vector<8x192xf32>
    %97 = tpu.matmul %96, %0, %cst_22 {dimension_numbers = #tpu.dot_dimension_numbers<[1], [0], [0], [1], [0, 0, 1, 1], [], []>} : vector<8x64xbf16>, vector<64x192xbf16>, vector<8x192xf32> -> vector<8x192xf32>
    %c4 = arith.constant 4 : index
    %c0_23 = arith.constant 0 : index
    %c0_24 = arith.constant 0 : index
    %98 = vector.load %arg0[%c4, %c0_23, %c0_24] : memref<8x8x192xf32, #tpu.memory_space<vmem>>, vector<1x8x192xf32>
    %99 = vector.shape_cast %98 : vector<1x8x192xf32> to vector<8x192xf32>
    %100 = vector.extract_strided_slice %99 {offsets = [0, 0], sizes = [8, 128], strides = [1, 1]} : vector<8x192xf32> to vector<8x128xf32>
    %101 = vector.extract_strided_slice %97 {offsets = [0, 0], sizes = [8, 128], strides = [1, 1]} : vector<8x192xf32> to vector<8x128xf32>
    %102 = arith.addf %100, %101 : vector<8x128xf32>
    %103 = arith.negf %102 : vector<8x128xf32>
    %104 = math.exp %103 : vector<8x128xf32>
    %cst_25 = arith.constant 1.000000e+00 : f32
    %105 = vector.broadcast %cst_25 : f32 to vector<8x128xf32>
    %106 = arith.addf %105, %104 : vector<8x128xf32>
    %107 = arith.divf %105, %106 : vector<8x128xf32>
    %108 = vector.extract_strided_slice %107 {offsets = [0, 0], sizes = [8, 64], strides = [1, 1]} : vector<8x128xf32> to vector<8x64xf32>
    %109 = vector.extract_strided_slice %107 {offsets = [0, 64], sizes = [8, 64], strides = [1, 1]} : vector<8x128xf32> to vector<8x64xf32>
    %110 = vector.extract_strided_slice %99 {offsets = [0, 128], sizes = [8, 64], strides = [1, 1]} : vector<8x192xf32> to vector<8x64xf32>
    %111 = vector.extract_strided_slice %97 {offsets = [0, 128], sizes = [8, 64], strides = [1, 1]} : vector<8x192xf32> to vector<8x64xf32>
    %112 = arith.addf %111, %3 : vector<8x64xf32>
    %113 = arith.mulf %108, %112 : vector<8x64xf32>
    %114 = arith.addf %110, %113 : vector<8x64xf32>
    %115 = math.tanh %114 : vector<8x64xf32>
    %cst_26 = arith.constant 1.000000e+00 : f32
    %116 = vector.broadcast %cst_26 : f32 to vector<8x64xf32>
    %117 = arith.subf %116, %109 : vector<8x64xf32>
    %118 = arith.mulf %117, %115 : vector<8x64xf32>
    %119 = arith.mulf %109, %95 : vector<8x64xf32>
    %120 = arith.addf %118, %119 : vector<8x64xf32>
    %121 = arith.truncf %120 : vector<8x64xf32> to vector<8x64xbf16>
    %cst_27 = arith.constant dense<0.000000e+00> : vector<8x192xf32>
    %122 = tpu.matmul %121, %0, %cst_27 {dimension_numbers = #tpu.dot_dimension_numbers<[1], [0], [0], [1], [0, 0, 1, 1], [], []>} : vector<8x64xbf16>, vector<64x192xbf16>, vector<8x192xf32> -> vector<8x192xf32>
    %c5 = arith.constant 5 : index
    %c0_28 = arith.constant 0 : index
    %c0_29 = arith.constant 0 : index
    %123 = vector.load %arg0[%c5, %c0_28, %c0_29] : memref<8x8x192xf32, #tpu.memory_space<vmem>>, vector<1x8x192xf32>
    %124 = vector.shape_cast %123 : vector<1x8x192xf32> to vector<8x192xf32>
    %125 = vector.extract_strided_slice %124 {offsets = [0, 0], sizes = [8, 128], strides = [1, 1]} : vector<8x192xf32> to vector<8x128xf32>
    %126 = vector.extract_strided_slice %122 {offsets = [0, 0], sizes = [8, 128], strides = [1, 1]} : vector<8x192xf32> to vector<8x128xf32>
    %127 = arith.addf %125, %126 : vector<8x128xf32>
    %128 = arith.negf %127 : vector<8x128xf32>
    %129 = math.exp %128 : vector<8x128xf32>
    %cst_30 = arith.constant 1.000000e+00 : f32
    %130 = vector.broadcast %cst_30 : f32 to vector<8x128xf32>
    %131 = arith.addf %130, %129 : vector<8x128xf32>
    %132 = arith.divf %130, %131 : vector<8x128xf32>
    %133 = vector.extract_strided_slice %132 {offsets = [0, 0], sizes = [8, 64], strides = [1, 1]} : vector<8x128xf32> to vector<8x64xf32>
    %134 = vector.extract_strided_slice %132 {offsets = [0, 64], sizes = [8, 64], strides = [1, 1]} : vector<8x128xf32> to vector<8x64xf32>
    %135 = vector.extract_strided_slice %124 {offsets = [0, 128], sizes = [8, 64], strides = [1, 1]} : vector<8x192xf32> to vector<8x64xf32>
    %136 = vector.extract_strided_slice %122 {offsets = [0, 128], sizes = [8, 64], strides = [1, 1]} : vector<8x192xf32> to vector<8x64xf32>
    %137 = arith.addf %136, %3 : vector<8x64xf32>
    %138 = arith.mulf %133, %137 : vector<8x64xf32>
    %139 = arith.addf %135, %138 : vector<8x64xf32>
    %140 = math.tanh %139 : vector<8x64xf32>
    %cst_31 = arith.constant 1.000000e+00 : f32
    %141 = vector.broadcast %cst_31 : f32 to vector<8x64xf32>
    %142 = arith.subf %141, %134 : vector<8x64xf32>
    %143 = arith.mulf %142, %140 : vector<8x64xf32>
    %144 = arith.mulf %134, %120 : vector<8x64xf32>
    %145 = arith.addf %143, %144 : vector<8x64xf32>
    %146 = arith.truncf %145 : vector<8x64xf32> to vector<8x64xbf16>
    %cst_32 = arith.constant dense<0.000000e+00> : vector<8x192xf32>
    %147 = tpu.matmul %146, %0, %cst_32 {dimension_numbers = #tpu.dot_dimension_numbers<[1], [0], [0], [1], [0, 0, 1, 1], [], []>} : vector<8x64xbf16>, vector<64x192xbf16>, vector<8x192xf32> -> vector<8x192xf32>
    %c6 = arith.constant 6 : index
    %c0_33 = arith.constant 0 : index
    %c0_34 = arith.constant 0 : index
    %148 = vector.load %arg0[%c6, %c0_33, %c0_34] : memref<8x8x192xf32, #tpu.memory_space<vmem>>, vector<1x8x192xf32>
    %149 = vector.shape_cast %148 : vector<1x8x192xf32> to vector<8x192xf32>
    %150 = vector.extract_strided_slice %149 {offsets = [0, 0], sizes = [8, 128], strides = [1, 1]} : vector<8x192xf32> to vector<8x128xf32>
    %151 = vector.extract_strided_slice %147 {offsets = [0, 0], sizes = [8, 128], strides = [1, 1]} : vector<8x192xf32> to vector<8x128xf32>
    %152 = arith.addf %150, %151 : vector<8x128xf32>
    %153 = arith.negf %152 : vector<8x128xf32>
    %154 = math.exp %153 : vector<8x128xf32>
    %cst_35 = arith.constant 1.000000e+00 : f32
    %155 = vector.broadcast %cst_35 : f32 to vector<8x128xf32>
    %156 = arith.addf %155, %154 : vector<8x128xf32>
    %157 = arith.divf %155, %156 : vector<8x128xf32>
    %158 = vector.extract_strided_slice %157 {offsets = [0, 0], sizes = [8, 64], strides = [1, 1]} : vector<8x128xf32> to vector<8x64xf32>
    %159 = vector.extract_strided_slice %157 {offsets = [0, 64], sizes = [8, 64], strides = [1, 1]} : vector<8x128xf32> to vector<8x64xf32>
    %160 = vector.extract_strided_slice %149 {offsets = [0, 128], sizes = [8, 64], strides = [1, 1]} : vector<8x192xf32> to vector<8x64xf32>
    %161 = vector.extract_strided_slice %147 {offsets = [0, 128], sizes = [8, 64], strides = [1, 1]} : vector<8x192xf32> to vector<8x64xf32>
    %162 = arith.addf %161, %3 : vector<8x64xf32>
    %163 = arith.mulf %158, %162 : vector<8x64xf32>
    %164 = arith.addf %160, %163 : vector<8x64xf32>
    %165 = math.tanh %164 : vector<8x64xf32>
    %cst_36 = arith.constant 1.000000e+00 : f32
    %166 = vector.broadcast %cst_36 : f32 to vector<8x64xf32>
    %167 = arith.subf %166, %159 : vector<8x64xf32>
    %168 = arith.mulf %167, %165 : vector<8x64xf32>
    %169 = arith.mulf %159, %145 : vector<8x64xf32>
    %170 = arith.addf %168, %169 : vector<8x64xf32>
    %171 = arith.truncf %170 : vector<8x64xf32> to vector<8x64xbf16>
    %cst_37 = arith.constant dense<0.000000e+00> : vector<8x192xf32>
    %172 = tpu.matmul %171, %0, %cst_37 {dimension_numbers = #tpu.dot_dimension_numbers<[1], [0], [0], [1], [0, 0, 1, 1], [], []>} : vector<8x64xbf16>, vector<64x192xbf16>, vector<8x192xf32> -> vector<8x192xf32>
    %c7 = arith.constant 7 : index
    %c0_38 = arith.constant 0 : index
    %c0_39 = arith.constant 0 : index
    %173 = vector.load %arg0[%c7, %c0_38, %c0_39] : memref<8x8x192xf32, #tpu.memory_space<vmem>>, vector<1x8x192xf32>
    %174 = vector.shape_cast %173 : vector<1x8x192xf32> to vector<8x192xf32>
    %175 = vector.extract_strided_slice %174 {offsets = [0, 0], sizes = [8, 128], strides = [1, 1]} : vector<8x192xf32> to vector<8x128xf32>
    %176 = vector.extract_strided_slice %172 {offsets = [0, 0], sizes = [8, 128], strides = [1, 1]} : vector<8x192xf32> to vector<8x128xf32>
    %177 = arith.addf %175, %176 : vector<8x128xf32>
    %178 = arith.negf %177 : vector<8x128xf32>
    %179 = math.exp %178 : vector<8x128xf32>
    %cst_40 = arith.constant 1.000000e+00 : f32
    %180 = vector.broadcast %cst_40 : f32 to vector<8x128xf32>
    %181 = arith.addf %180, %179 : vector<8x128xf32>
    %182 = arith.divf %180, %181 : vector<8x128xf32>
    %183 = vector.extract_strided_slice %182 {offsets = [0, 0], sizes = [8, 64], strides = [1, 1]} : vector<8x128xf32> to vector<8x64xf32>
    %184 = vector.extract_strided_slice %182 {offsets = [0, 64], sizes = [8, 64], strides = [1, 1]} : vector<8x128xf32> to vector<8x64xf32>
    %185 = vector.extract_strided_slice %174 {offsets = [0, 128], sizes = [8, 64], strides = [1, 1]} : vector<8x192xf32> to vector<8x64xf32>
    %186 = vector.extract_strided_slice %172 {offsets = [0, 128], sizes = [8, 64], strides = [1, 1]} : vector<8x192xf32> to vector<8x64xf32>
    %187 = arith.addf %186, %3 : vector<8x64xf32>
    %188 = arith.mulf %183, %187 : vector<8x64xf32>
    %189 = arith.addf %185, %188 : vector<8x64xf32>
    %190 = math.tanh %189 : vector<8x64xf32>
    %cst_41 = arith.constant 1.000000e+00 : f32
    %191 = vector.broadcast %cst_41 : f32 to vector<8x64xf32>
    %192 = arith.subf %191, %184 : vector<8x64xf32>
    %193 = arith.mulf %192, %190 : vector<8x64xf32>
    %194 = arith.mulf %184, %170 : vector<8x64xf32>
    %195 = arith.addf %193, %194 : vector<8x64xf32>
    %196 = arith.truncf %195 : vector<8x64xf32> to vector<8x64xbf16>
    %c0_42 = arith.constant 0 : index
    %c0_43 = arith.constant 0 : index
    %197 = vector.load %arg3[%c0_42, %c0_43] : memref<64x128xbf16, #tpu.memory_space<vmem>>, vector<64x128xbf16>
    %cst_44 = arith.constant dense<0.000000e+00> : vector<8x128xf32>
    %198 = tpu.matmul %196, %197, %cst_44 {dimension_numbers = #tpu.dot_dimension_numbers<[1], [0], [0], [1], [0, 0, 1, 1], [], []>} : vector<8x64xbf16>, vector<64x128xbf16>, vector<8x128xf32> -> vector<8x128xf32>
    %c0_45 = arith.constant 0 : index
    %c0_46 = arith.constant 0 : index
    %199 = vector.load %arg4[%c0_45, %c0_46] : memref<1x128xf32, #tpu.memory_space<vmem>>, vector<1x128xf32>
    %200 = vector.broadcast %199 : vector<1x128xf32> to vector<8x128xf32>
    %201 = arith.addf %198, %200 : vector<8x128xf32>
    %cst_47 = arith.constant 0.000000e+00 : f32
    %202 = vector.broadcast %cst_47 : f32 to vector<8x128xf32>
    %203 = arith.maximumf %201, %202 : vector<8x128xf32>
    %204 = arith.truncf %203 : vector<8x128xf32> to vector<8x128xbf16>
    %c0_48 = arith.constant 0 : index
    %c0_49 = arith.constant 0 : index
    %205 = vector.load %arg5[%c0_48, %c0_49] : memref<128x128xbf16, #tpu.memory_space<vmem>>, vector<128x128xbf16>
    %cst_50 = arith.constant dense<0.000000e+00> : vector<8x128xf32>
    %206 = tpu.matmul %204, %205, %cst_50 {dimension_numbers = #tpu.dot_dimension_numbers<[1], [0], [0], [1], [0, 0, 1, 1], [], []>} : vector<8x128xbf16>, vector<128x128xbf16>, vector<8x128xf32> -> vector<8x128xf32>
    %c0_51 = arith.constant 0 : index
    %c0_52 = arith.constant 0 : index
    %207 = vector.load %arg6[%c0_51, %c0_52] : memref<1x128xf32, #tpu.memory_space<vmem>>, vector<1x128xf32>
    %208 = vector.broadcast %207 : vector<1x128xf32> to vector<8x128xf32>
    %209 = arith.addf %206, %208 : vector<8x128xf32>
    %c0_53 = arith.constant 0 : index
    %c0_54 = arith.constant 0 : index
    %210 = vector.load %arg7[%c0_53, %c0_54] : memref<8x128xf32, #tpu.memory_space<vmem>>, vector<8x128xf32>
    tpu.vector_store %arg7[%c0_53, %c0_54], %209 {strides = array<i32>} : memref<8x128xf32, #tpu.memory_space<vmem>>, vector<8x128xf32>,
    return
  }
}

</mosaic_0001>

<llo_original>
// kernel: gru_classifier_forward.1
$region0: #{gru_classifier_forward.1}
  #allocation0 [shape = 'u32[]', space=smem, size = 0x4, offset = 0x4, fixed_abs, tag = 'smem constant byte address 0x4 - core index']
  #allocation1 [shape = 'u32[144,128]{1,0:T(1,128)}', space=vmem, size = 0x12000, scoped, tag = 'internal scratch']
  %s0 = inlined_call_operand.vmem [shape: f32[8,8,192], index: 0, kind: input, shape index: {}]
  %s1 = inlined_call_operand.vmem [shape: bf16[64,192], index: 1, kind: input, shape index: {}]
  %s2 = inlined_call_operand.vmem [shape: f32[1,64], index: 2, kind: input, shape index: {}]
  %s3 = inlined_call_operand.vmem [shape: bf16[64,128], index: 3, kind: input, shape index: {}]
  %s4 = inlined_call_operand.vmem [shape: f32[1,128], index: 4, kind: input, shape index: {}]
  %s5 = inlined_call_operand.vmem [shape: bf16[128,128], index: 5, kind: input, shape index: {}]
  %s6 = inlined_call_operand.vmem [shape: f32[1,128], index: 6, kind: input, shape index: {}]
  %s7 = inlined_call_operand.vmem [shape: f32[8,128], index: 7, kind: output, shape index: {}]
  %s8 = sld [smem:[#allocation0]]
  $region38: #{gru_classifier_forward.1} parent=0
    _
  %s10 = ssub.s32 1, %s8
  %s11 = scalar_select 0, %s10, %s8
  // Predicated region
  $region2: #{gru_classifier_forward.1} parent=0 // pred_check
    _
  $region3: #{gru_classifier_forward.1} parent=0 // pred_check_branch
    %13 = sbr.rel (0) target = $region5
  $region4: #{gru_classifier_forward.1} parent=0 // pred_region
    _
  $region5: #{gru_classifier_forward.1} parent=0 // pred_fallthru
    _
  // Predicated region
  $region6: #{gru_classifier_forward.1} parent=0 // pred_check
    _
  $region7: #{gru_classifier_forward.1} parent=0 // pred_check_branch
    %15 = sbr.rel (0) target = $region9
  $region8: #{gru_classifier_forward.1} parent=0 // pred_region
    _
  $region9: #{gru_classifier_forward.1} parent=0 // pred_fallthru
    _
  // Predicated region
  $region10: #{gru_classifier_forward.1} parent=0 // pred_check
    _
  $region11: #{gru_classifier_forward.1} parent=0 // pred_check_branch
    %17 = sbr.rel (0) target = $region13
  $region12: #{gru_classifier_forward.1} parent=0 // pred_region
    _
  $region13: #{gru_classifier_forward.1} parent=0 // pred_fallthru
    _
  // Predicated region
  $region14: #{gru_classifier_forward.1} parent=0 // pred_check
    _
  $region15: #{gru_classifier_forward.1} parent=0 // pred_check_branch
    %19 = sbr.rel (0) target = $region17
  $region16: #{gru_classifier_forward.1} parent=0 // pred_region
    _
  $region17: #{gru_classifier_forward.1} parent=0 // pred_fallthru
    _
  // Predicated region
  $region18: #{gru_classifier_forward.1} parent=0 // pred_check
    _
  $region19: #{gru_classifier_forward.1} parent=0 // pred_check_branch
    %21 = sbr.rel (0) target = $region21
  $region20: #{gru_classifier_forward.1} parent=0 // pred_region
    _
  $region21: #{gru_classifier_forward.1} parent=0 // pred_fallthru
    _
  // Predicated region
  $region22: #{gru_classifier_forward.1} parent=0 // pred_check
    _
  $region23: #{gru_classifier_forward.1} parent=0 // pred_check_branch
    %23 = sbr.rel (0) target = $region25
  $region24: #{gru_classifier_forward.1} parent=0 // pred_region
    _
  $region25: #{gru_classifier_forward.1} parent=0 // pred_fallthru
    _
  // Predicated region
  $region26: #{gru_classifier_forward.1} parent=0 // pred_check
    _
  $region27: #{gru_classifier_forward.1} parent=0 // pred_check_branch
    %25 = sbr.rel (0) target = $region29
  $region28: #{gru_classifier_forward.1} parent=0 // pred_region
    _
  $region29: #{gru_classifier_forward.1} parent=0 // pred_fallthru
    _
  %v27 = vld [vmem:[%s1] sm:$0xff]
  %v28 = vld [vmem:[%s1 + $0x8] sm:$0xff]
  %v29 = vld [vmem:[%s1 + $0x10] sm:$0xff]
  %v30 = vld [vmem:[%s1 + $0x18] sm:$0xff]
  %v31 = vld [vmem:[%s1 + $0x20] sm:$0xff]
  %v32 = vld [vmem:[%s1 + $0x28] sm:$0xff]
  %v33 = vld [vmem:[%s1 + $0x30] sm:$0xff]
  %v34 = vld [vmem:[%s1 + $0x38] sm:$0xff]
  %v35 = vld [vmem:[%s2] sm:$0x1]
  %v37 = vlaneseq
  %v38 = vshrl.u32 %v37, 7
  %v39 = vsub.s32 0, %v38
  %v40 = vrot.slane %v35, %v39
  %v42 = vld [vmem:[%s0] sm:$0xff]
  %v43 = vld [vmem:[%s0 + $0x8] sm:$0xff]
  %v44 = vxor.u32 %v42, 2147483648
  %v45 = vmul.f32 %v44, 1.442695
  %v46 = vpow.pop %v45
  %v47 = vadd.f32 %v46, 1.0
  %v48 = vrcp.pop %v47
  %v49 = vmul.f32 1.0, %v48
  %v50 = vmul.f32 %v49, %v40
  %v51 = vadd.f32 %v43, %v50
  %v52 = vtanh.pop %v51
  %v53 = vsub.f32 1.0, %v49
  %55 = vrot.lane.b32.xlu0 %v52, 64
  %v56 = vpop.permute.xlu0 %55
  %v58 = vmul.f32 %v53, %v56
  %v59 = vpack.c.bf16 %v58, %v58
  %61 = vrot.lane.b32.xlu0 %v59, 64
  %v62 = vpop.permute.xlu0 %61
  %v71 = vunpack.c.l.b16 %v27
  %v72 = vunpack.c.h.b16 %v27
  %v73 = vunpack.c.l.b16 %v28
  %v74 = vunpack.c.h.b16 %v28
  %v75 = vunpack.c.l.b16 %v29
  %v76 = vunpack.c.h.b16 %v29
  %v77 = vunpack.c.l.b16 %v30
  %v78 = vunpack.c.h.b16 %v30
  %v79 = vunpack.c.l.b16 %v31
  %v80 = vunpack.c.h.b16 %v31
  %v81 = vunpack.c.l.b16 %v32
  %v82 = vunpack.c.h.b16 %v32
  %v83 = vunpack.c.l.b16 %v33
  %v84 = vunpack.c.h.b16 %v33
  %v85 = vunpack.c.l.b16 %v34
  %v86 = vunpack.c.h.b16 %v34
  %v87 = vpack.c.b16 %v73, %v71
  %v88 = vpack.c.b16 %v74, %v72
  %v89 = vpack.c.b16 %v77, %v75
  %v90 = vpack.c.b16 %v78, %v76
  %v91 = vpack.c.b16 %v81, %v79
  %v92 = vpack.c.b16 %v82, %v80
  %v93 = vpack.c.b16 %v85, %v83
  %v94 = vpack.c.b16 %v86, %v84
  %vm103 = vcmask 523264
  %v105 = vsel %vm103, %v62, 0
  %107 = vmatprep.subr.bf16.mxu0 %v88
  %108 = vmatpush1.bf16.msra.mxu0 %v87
  %109 = vmatprep.subr.bf16.mxu0 %v90
  %110 = vmatpush1.bf16.msra.mxu0 %v89
  %111 = vmatprep.subr.bf16.mxu0 %v92
  %112 = vmatpush1.bf16.msra.mxu0 %v91
  %113 = vmatprep.subr.bf16.mxu0 %v94
  %114 = vmatpush1.bf16.msra.mxu0 %v93
  %115 = vmatprep.subr.bf16.mxu0 0
  %116 = vmatpush1.bf16.msra.mxu0 0
  %117 = vmatprep.subr.bf16.mxu0 0
  %118 = vmatpush1.bf16.msra.mxu0 0
  %119 = vmatprep.subr.bf16.mxu0 0
  %120 = vmatpush1.bf16.msra.mxu0 0
  %121 = vmatprep.subr.bf16.mxu0 0
  %122 = vmatpush1.bf16.msra.mxu0 0
  %123 = vmatprep.subr.bf16.mxu0 0
  %124 = vmatpush1.bf16.msra.mxu0 0
  %125 = vmatprep.subr.bf16.mxu0 0
  %126 = vmatpush1.bf16.msra.mxu0 0
  %127 = vmatprep.subr.bf16.mxu0 0
  %128 = vmatpush1.bf16.msra.mxu0 0
  %129 = vmatprep.subr.bf16.mxu0 0
  %130 = vmatpush1.bf16.msra.mxu0 0
  %131 = vmatprep.subr.bf16.mxu0 0
  %132 = vmatpush1.bf16.msra.mxu0 0
  %133 = vmatprep.subr.bf16.mxu0 0
  %134 = vmatpush1.bf16.msra.mxu0 0
  %135 = vmatprep.subr.bf16.mxu0 0
  %136 = vmatpush1.bf16.msra.mxu0 0
  %137 = vmatprep.subr.bf16.mxu0 0
  %138 = vmatpush1.bf16.msra.mxu0 0
  %139 = vmatprep.mubr.bf16.mxu0 0
  %140 = vmatmul.mubr.bf16.gmra.mrb[0].mxu0 %v105
  %v141 = vpop.f32.mrb[0].mxu0
  %v142 = vadd.f32 0.0, %v141
  %v143 = vpop.f32.mrb[0].mxu0
  %v144 = vadd.f32 0.0, %v143
  %v145 = vpop.f32.mrb[0].mxu0
  %v146 = vpop.f32.mrb[0].mxu0
  %147 = vdwg.mxu0
  %s148 = scalar_lea.vmem %s0, 16
  %v149 = vld [vmem:[%s148] sm:$0xff]
  %v150 = vld [vmem:[%s148 + $0x8] sm:$0xff]
  %v151 = vadd.f32 %v149, %v142
  %v152 = vxor.u32 %v151, 2147483648
  %v153 = vmul.f32 %v152, 1.442695
  %v154 = vpow.pop %v153
  %v155 = vadd.f32 %v154, 1.0
  %v156 = vrcp.pop %v155
  %v157 = vmul.f32 1.0, %v156
  %v158 = vadd.f32 %v144, %v40
  %v159 = vmul.f32 %v157, %v158
  %v160 = vadd.f32 %v150, %v159
  %v161 = vtanh.pop %v160
  %v162 = vsub.f32 1.0, %v157
  %164 = vrot.lane.b32.xlu0 %v161, 64
  %v165 = vpop.permute.xlu0 %164
  %v167 = vmul.f32 %v162, %v165
  %v168 = vmul.f32 %v157, %v58
  %v169 = vadd.f32 %v167, %v168
  %v170 = vpack.c.bf16 %v169, %v169
  %172 = vrot.lane.b32.xlu0 %v170, 64
  %v173 = vpop.permute.xlu0 %172
  %v175 = vsel %vm103, %v173, 0
  %177 = vmatprep.subr.bf16.mxu0 %v88
  %178 = vmatpush1.bf16.msra.mxu0 %v87
  %179 = vmatprep.subr.bf16.mxu0 %v90
  %180 = vmatpush1.bf16.msra.mxu0 %v89
  %181 = vmatprep.subr.bf16.mxu0 %v92
  %182 = vmatpush1.bf16.msra.mxu0 %v91
  %183 = vmatprep.subr.bf16.mxu0 %v94
  %184 = vmatpush1.bf16.msra.mxu0 %v93
  %185 = vmatprep.subr.bf16.mxu0 0
  %186 = vmatpush1.bf16.msra.mxu0 0
  %187 = vmatprep.subr.bf16.mxu0 0
  %188 = vmatpush1.bf16.msra.mxu0 0
  %189 = vmatprep.subr.bf16.mxu0 0
  %190 = vmatpush1.bf16.msra.mxu0 0
  %191 = vmatprep.subr.bf16.mxu0 0
  %192 = vmatpush1.bf16.msra.mxu0 0
  %193 = vmatprep.subr.bf16.mxu0 0
  %194 = vmatpush1.bf16.msra.mxu0 0
  %195 = vmatprep.subr.bf16.mxu0 0
  %196 = vmatpush1.bf16.msra.mxu0 0
  %197 = vmatprep.subr.bf16.mxu0 0
  %198 = vmatpush1.bf16.msra.mxu0 0
  %199 = vmatprep.subr.bf16.mxu0 0
  %200 = vmatpush1.bf16.msra.mxu0 0
  %201 = vmatprep.subr.bf16.mxu0 0
  %202 = vmatpush1.bf16.msra.mxu0 0
  %203 = vmatprep.subr.bf16.mxu0 0
  %204 = vmatpush1.bf16.msra.mxu0 0
  %205 = vmatprep.subr.bf16.mxu0 0
  %206 = vmatpush1.bf16.msra.mxu0 0
  %207 = vmatprep.subr.bf16.mxu0 0
  %208 = vmatpush1.bf16.msra.mxu0 0
  %209 = vmatprep.mubr.bf16.mxu0 0
  %210 = vmatmul.mubr.bf16.gmra.mrb[0].mxu0 %v175
  %v211 = vpop.f32.mrb[0].mxu0
  %v212 = vadd.f32 0.0, %v211
  %v213 = vpop.f32.mrb[0].mxu0
  %v214 = vadd.f32 0.0, %v213
  %v215 = vpop.f32.mrb[0].mxu0
  %v216 = vpop.f32.mrb[0].mxu0
  %217 = vdwg.mxu0
  %s218 = scalar_lea.vmem %s0, 32
  %v219 = vld [vmem:[%s218] sm:$0xff]
  %v220 = vld [vmem:[%s218 + $0x8] sm:$0xff]
  %v221 = vadd.f32 %v219, %v212
  %v222 = vxor.u32 %v221, 2147483648
  %v223 = vmul.f32 %v222, 1.442695
  %v224 = vpow.pop %v223
  %v225 = vadd.f32 %v224, 1.0
  %v226 = vrcp.pop %v225
  %v227 = vmul.f32 1.0, %v226
  %v228 = vadd.f32 %v214, %v40
  %v229 = vmul.f32 %v227, %v228
  %v230 = vadd.f32 %v220, %v229
  %v231 = vtanh.pop %v230
  %v232 = vsub.f32 1.0, %v227
  %234 = vrot.lane.b32.xlu0 %v231, 64
  %v235 = vpop.permute.xlu0 %234
  %v237 = vmul.f32 %v232, %v235
  %v238 = vmul.f32 %v227, %v169
  %v239 = vadd.f32 %v237, %v238
  %v240 = vpack.c.bf16 %v239, %v239
  %242 = vrot.lane.b32.xlu0 %v240, 64
  %v243 = vpop.permute.xlu0 %242
  %v245 = vsel %vm103, %v243, 0
  %247 = vmatprep.subr.bf16.mxu0 %v88
  %248 = vmatpush1.bf16.msra.mxu0 %v87
  %249 = vmatprep.subr.bf16.mxu0 %v90
  %250 = vmatpush1.bf16.msra.mxu0 %v89
  %251 = vmatprep.subr.bf16.mxu0 %v92
  %252 = vmatpush1.bf16.msra.mxu0 %v91
  %253 = vmatprep.subr.bf16.mxu0 %v94
  %254 = vmatpush1.bf16.msra.mxu0 %v93
  %255 = vmatprep.subr.bf16.mxu0 0
  %256 = vmatpush1.bf16.msra.mxu0 0
  %257 = vmatprep.subr.bf16.mxu0 0
  %258 = vmatpush1.bf16.msra.mxu0 0
  %259 = vmatprep.subr.bf16.mxu0 0
  %260 = vmatpush1.bf16.msra.mxu0 0
  %261 = vmatprep.subr.bf16.mxu0 0
  %262 = vmatpush1.bf16.msra.mxu0 0
  %263 = vmatprep.subr.bf16.mxu0 0
  %264 = vmatpush1.bf16.msra.mxu0 0
  %265 = vmatprep.subr.bf16.mxu0 0
  %266 = vmatpush1.bf16.msra.mxu0 0
  %267 = vmatprep.subr.bf16.mxu0 0
  %268 = vmatpush1.bf16.msra.mxu0 0
  %269 = vmatprep.subr.bf16.mxu0 0
  %270 = vmatpush1.bf16.msra.mxu0 0
  %271 = vmatprep.subr.bf16.mxu0 0
  %272 = vmatpush1.bf16.msra.mxu0 0
  %273 = vmatprep.subr.bf16.mxu0 0
  %274 = vmatpush1.bf16.msra.mxu0 0
  %275 = vmatprep.subr.bf16.mxu0 0
  %276 = vmatpush1.bf16.msra.mxu0 0
  %277 = vmatprep.subr.bf16.mxu0 0
  %278 = vmatpush1.bf16.msra.mxu0 0
  %279 = vmatprep.mubr.bf16.mxu0 0
  %280 = vmatmul.mubr.bf16.gmra.mrb[0].mxu0 %v245
  %v281 = vpop.f32.mrb[0].mxu0
  %v282 = vadd.f32 0.0, %v281
  %v283 = vpop.f32.mrb[0].mxu0
  %v284 = vadd.f32 0.0, %v283
  %v285 = vpop.f32.mrb[0].mxu0
  %v286 = vpop.f32.mrb[0].mxu0
  %287 = vdwg.mxu0
  %s288 = scalar_lea.vmem %s0, 48
  %v289 = vld [vmem:[%s288] sm:$0xff]
  %v290 = vld [vmem:[%s288 + $0x8] sm:$0xff]
  %v291 = vadd.f32 %v289, %v282
  %v292 = vxor.u32 %v291, 2147483648
  %v293 = vmul.f32 %v292, 1.442695
  %v294 = vpow.pop %v293
  %v295 = vadd.f32 %v294, 1.0
  %v296 = vrcp.pop %v295
  %v297 = vmul.f32 1.0, %v296
  %v298 = vadd.f32 %v284, %v40
  %v299 = vmul.f32 %v297, %v298
  %v300 = vadd.f32 %v290, %v299
  %v301 = vtanh.pop %v300
  %v302 = vsub.f32 1.0, %v297
  %304 = vrot.lane.b32.xlu0 %v301, 64
  %v305 = vpop.permute.xlu0 %304
  %v307 = vmul.f32 %v302, %v305
  %v308 = vmul.f32 %v297, %v239
  %v309 = vadd.f32 %v307, %v308
  %v310 = vpack.c.bf16 %v309, %v309
  %312 = vrot.lane.b32.xlu0 %v310, 64
  %v313 = vpop.permute.xlu0 %312
  %v315 = vsel %vm103, %v313, 0
  %317 = vmatprep.subr.bf16.mxu0 %v88
  %318 = vmatpush1.bf16.msra.mxu0 %v87
  %319 = vmatprep.subr.bf16.mxu0 %v90
  %320 = vmatpush1.bf16.msra.mxu0 %v89
  %321 = vmatprep.subr.bf16.mxu0 %v92
  %322 = vmatpush1.bf16.msra.mxu0 %v91
  %323 = vmatprep.subr.bf16.mxu0 %v94
  %324 = vmatpush1.bf16.msra.mxu0 %v93
  %325 = vmatprep.subr.bf16.mxu0 0
  %326 = vmatpush1.bf16.msra.mxu0 0
  %327 = vmatprep.subr.bf16.mxu0 0
  %328 = vmatpush1.bf16.msra.mxu0 0
  %329 = vmatprep.subr.bf16.mxu0 0
  %330 = vmatpush1.bf16.msra.mxu0 0
  %331 = vmatprep.subr.bf16.mxu0 0
  %332 = vmatpush1.bf16.msra.mxu0 0
  %333 = vmatprep.subr.bf16.mxu0 0
  %334 = vmatpush1.bf16.msra.mxu0 0
  %335 = vmatprep.subr.bf16.mxu0 0
  %336 = vmatpush1.bf16.msra.mxu0 0
  %337 = vmatprep.subr.bf16.mxu0 0
  %338 = vmatpush1.bf16.msra.mxu0 0
  %339 = vmatprep.subr.bf16.mxu0 0
  %340 = vmatpush1.bf16.msra.mxu0 0
  %341 = vmatprep.subr.bf16.mxu0 0
  %342 = vmatpush1.bf16.msra.mxu0 0
  %343 = vmatprep.subr.bf16.mxu0 0
  %344 = vmatpush1.bf16.msra.mxu0 0
  %345 = vmatprep.subr.bf16.mxu0 0
  %346 = vmatpush1.bf16.msra.mxu0 0
  %347 = vmatprep.subr.bf16.mxu0 0
  %348 = vmatpush1.bf16.msra.mxu0 0
  %349 = vmatprep.mubr.bf16.mxu0 0
  %350 = vmatmul.mubr.bf16.gmra.mrb[0].mxu0 %v315
  %v351 = vpop.f32.mrb[0].mxu0
  %v352 = vadd.f32 0.0, %v351
  %v353 = vpop.f32.mrb[0].mxu0
  %v354 = vadd.f32 0.0, %v353
  %v355 = vpop.f32.mrb[0].mxu0
  %v356 = vpop.f32.mrb[0].mxu0
  %357 = vdwg.mxu0
  %s358 = scalar_lea.vmem %s0, 64
  %v359 = vld [vmem:[%s358] sm:$0xff]
  %v360 = vld [vmem:[%s358 + $0x8] sm:$0xff]
  %v361 = vadd.f32 %v359, %v352
  %v362 = vxor.u32 %v361, 2147483648
  %v363 = vmul.f32 %v362, 1.442695
  %v364 = vpow.pop %v363
  %v365 = vadd.f32 %v364, 1.0
  %v366 = vrcp.pop %v365
  %v367 = vmul.f32 1.0, %v366
  %v368 = vadd.f32 %v354, %v40
  %v369 = vmul.f32 %v367, %v368
  %v370 = vadd.f32 %v360, %v369
  %v371 = vtanh.pop %v370
  %v372 = vsub.f32 1.0, %v367
  %374 = vrot.lane.b32.xlu0 %v371, 64
  %v375 = vpop.permute.xlu0 %374
  %v377 = vmul.f32 %v372, %v375
  %v378 = vmul.f32 %v367, %v309
  %v379 = vadd.f32 %v377, %v378
  %v380 = vpack.c.bf16 %v379, %v379
  %382 = vrot.lane.b32.xlu0 %v380, 64
  %v383 = vpop.permute.xlu0 %382
  %v385 = vsel %vm103, %v383, 0
  %387 = vmatprep.subr.bf16.mxu0 %v88
  %388 = vmatpush1.bf16.msra.mxu0 %v87
  %389 = vmatprep.subr.bf16.mxu0 %v90
  %390 = vmatpush1.bf16.msra.mxu0 %v89
  %391 = vmatprep.subr.bf16.mxu0 %v92
  %392 = vmatpush1.bf16.msra.mxu0 %v91
  %393 = vmatprep.subr.bf16.mxu0 %v94
  %394 = vmatpush1.bf16.msra.mxu0 %v93
  %395 = vmatprep.subr.bf16.mxu0 0
  %396 = vmatpush1.bf16.msra.mxu0 0
  %397 = vmatprep.subr.bf16.mxu0 0
  %398 = vmatpush1.bf16.msra.mxu0 0
  %399 = vmatprep.subr.bf16.mxu0 0
  %400 = vmatpush1.bf16.msra.mxu0 0
  %401 = vmatprep.subr.bf16.mxu0 0
  %402 = vmatpush1.bf16.msra.mxu0 0
  %403 = vmatprep.subr.bf16.mxu0 0
  %404 = vmatpush1.bf16.msra.mxu0 0
  %405 = vmatprep.subr.bf16.mxu0 0
  %406 = vmatpush1.bf16.msra.mxu0 0
  %407 = vmatprep.subr.bf16.mxu0 0
  %408 = vmatpush1.bf16.msra.mxu0 0
  %409 = vmatprep.subr.bf16.mxu0 0
  %410 = vmatpush1.bf16.msra.mxu0 0
  %411 = vmatprep.subr.bf16.mxu0 0
  %412 = vmatpush1.bf16.msra.mxu0 0
  %413 = vmatprep.subr.bf16.mxu0 0
  %414 = vmatpush1.bf16.msra.mxu0 0
  %415 = vmatprep.subr.bf16.mxu0 0
  %416 = vmatpush1.bf16.msra.mxu0 0
  %417 = vmatprep.subr.bf16.mxu0 0
  %418 = vmatpush1.bf16.msra.mxu0 0
  %419 = vmatprep.mubr.bf16.mxu0 0
  %420 = vmatmul.mubr.bf16.gmra.mrb[0].mxu0 %v385
  %v421 = vpop.f32.mrb[0].mxu0
  %v422 = vadd.f32 0.0, %v421
  %v423 = vpop.f32.mrb[0].mxu0
  %v424 = vadd.f32 0.0, %v423
  %v425 = vpop.f32.mrb[0].mxu0
  %v426 = vpop.f32.mrb[0].mxu0
  %427 = vdwg.mxu0
  %s428 = scalar_lea.vmem %s0, 80
  %v429 = vld [vmem:[%s428] sm:$0xff]
  %v430 = vld [vmem:[%s428 + $0x8] sm:$0xff]
  %v431 = vadd.f32 %v429, %v422
  %v432 = vxor.u32 %v431, 2147483648
  %v433 = vmul.f32 %v432, 1.442695
  %v434 = vpow.pop %v433
  %v435 = vadd.f32 %v434, 1.0
  %v436 = vrcp.pop %v435
  %v437 = vmul.f32 1.0, %v436
  %v438 = vadd.f32 %v424, %v40
  %v439 = vmul.f32 %v437, %v438
  %v440 = vadd.f32 %v430, %v439
  %v441 = vtanh.pop %v440
  %v442 = vsub.f32 1.0, %v437
  %444 = vrot.lane.b32.xlu0 %v441, 64
  %v445 = vpop.permute.xlu0 %444
  %v447 = vmul.f32 %v442, %v445
  %v448 = vmul.f32 %v437, %v379
  %v449 = vadd.f32 %v447, %v448
  %v450 = vpack.c.bf16 %v449, %v449
  %452 = vrot.lane.b32.xlu0 %v450, 64
  %v453 = vpop.permute.xlu0 %452
  %v455 = vsel %vm103, %v453, 0
  %457 = vmatprep.subr.bf16.mxu0 %v88
  %458 = vmatpush1.bf16.msra.mxu0 %v87
  %459 = vmatprep.subr.bf16.mxu0 %v90
  %460 = vmatpush1.bf16.msra.mxu0 %v89
  %461 = vmatprep.subr.bf16.mxu0 %v92
  %462 = vmatpush1.bf16.msra.mxu0 %v91
  %463 = vmatprep.subr.bf16.mxu0 %v94
  %464 = vmatpush1.bf16.msra.mxu0 %v93
  %465 = vmatprep.subr.bf16.mxu0 0
  %466 = vmatpush1.bf16.msra.mxu0 0
  %467 = vmatprep.subr.bf16.mxu0 0
  %468 = vmatpush1.bf16.msra.mxu0 0
  %469 = vmatprep.subr.bf16.mxu0 0
  %470 = vmatpush1.bf16.msra.mxu0 0
  %471 = vmatprep.subr.bf16.mxu0 0
  %472 = vmatpush1.bf16.msra.mxu0 0
  %473 = vmatprep.subr.bf16.mxu0 0
  %474 = vmatpush1.bf16.msra.mxu0 0
  %475 = vmatprep.subr.bf16.mxu0 0
  %476 = vmatpush1.bf16.msra.mxu0 0
  %477 = vmatprep.subr.bf16.mxu0 0
  %478 = vmatpush1.bf16.msra.mxu0 0
  %479 = vmatprep.subr.bf16.mxu0 0
  %480 = vmatpush1.bf16.msra.mxu0 0
  %481 = vmatprep.subr.bf16.mxu0 0
  %482 = vmatpush1.bf16.msra.mxu0 0
  %483 = vmatprep.subr.bf16.mxu0 0
  %484 = vmatpush1.bf16.msra.mxu0 0
  %485 = vmatprep.subr.bf16.mxu0 0
  %486 = vmatpush1.bf16.msra.mxu0 0
  %487 = vmatprep.subr.bf16.mxu0 0
  %488 = vmatpush1.bf16.msra.mxu0 0
  %489 = vmatprep.mubr.bf16.mxu0 0
  %490 = vmatmul.mubr.bf16.gmra.mrb[0].mxu0 %v455
  %v491 = vpop.f32.mrb[0].mxu0
  %v492 = vadd.f32 0.0, %v491
  %v493 = vpop.f32.mrb[0].mxu0
  %v494 = vadd.f32 0.0, %v493
  %v495 = vpop.f32.mrb[0].mxu0
  %v496 = vpop.f32.mrb[0].mxu0
  %497 = vdwg.mxu0
  %s498 = scalar_lea.vmem %s0, 96
  %v499 = vld [vmem:[%s498] sm:$0xff]
  %v500 = vld [vmem:[%s498 + $0x8] sm:$0xff]
  %v501 = vadd.f32 %v499, %v492
  %v502 = vxor.u32 %v501, 2147483648
  %v503 = vmul.f32 %v502, 1.442695
  %v504 = vpow.pop %v503
  %v505 = vadd.f32 %v504, 1.0
  %v506 = vrcp.pop %v505
  %v507 = vmul.f32 1.0, %v506
  %v508 = vadd.f32 %v494, %v40
  %v509 = vmul.f32 %v507, %v508
  %v510 = vadd.f32 %v500, %v509
  %v511 = vtanh.pop %v510
  %v512 = vsub.f32 1.0, %v507
  %514 = vrot.lane.b32.xlu0 %v511, 64
  %v515 = vpop.permute.xlu0 %514
  %v517 = vmul.f32 %v512, %v515
  %v518 = vmul.f32 %v507, %v449
  %v519 = vadd.f32 %v517, %v518
  %v520 = vpack.c.bf16 %v519, %v519
  %522 = vrot.lane.b32.xlu0 %v520, 64
  %v523 = vpop.permute.xlu0 %522
  %v525 = vsel %vm103, %v523, 0
  %527 = vmatprep.subr.bf16.mxu0 %v88
  %528 = vmatpush1.bf16.msra.mxu0 %v87
  %529 = vmatprep.subr.bf16.mxu0 %v90
  %530 = vmatpush1.bf16.msra.mxu0 %v89
  %531 = vmatprep.subr.bf16.mxu0 %v92
  %532 = vmatpush1.bf16.msra.mxu0 %v91
  %533 = vmatprep.subr.bf16.mxu0 %v94
  %534 = vmatpush1.bf16.msra.mxu0 %v93
  %535 = vmatprep.subr.bf16.mxu0 0
  %536 = vmatpush1.bf16.msra.mxu0 0
  %537 = vmatprep.subr.bf16.mxu0 0
  %538 = vmatpush1.bf16.msra.mxu0 0
  %539 = vmatprep.subr.bf16.mxu0 0
  %540 = vmatpush1.bf16.msra.mxu0 0
  %541 = vmatprep.subr.bf16.mxu0 0
  %542 = vmatpush1.bf16.msra.mxu0 0
  %543 = vmatprep.subr.bf16.mxu0 0
  %544 = vmatpush1.bf16.msra.mxu0 0
  %545 = vmatprep.subr.bf16.mxu0 0
  %546 = vmatpush1.bf16.msra.mxu0 0
  %547 = vmatprep.subr.bf16.mxu0 0
  %548 = vmatpush1.bf16.msra.mxu0 0
  %549 = vmatprep.subr.bf16.mxu0 0
  %550 = vmatpush1.bf16.msra.mxu0 0
  %551 = vmatprep.subr.bf16.mxu0 0
  %552 = vmatpush1.bf16.msra.mxu0 0
  %553 = vmatprep.subr.bf16.mxu0 0
  %554 = vmatpush1.bf16.msra.mxu0 0
  %555 = vmatprep.subr.bf16.mxu0 0
  %556 = vmatpush1.bf16.msra.mxu0 0
  %557 = vmatprep.subr.bf16.mxu0 0
  %558 = vmatpush1.bf16.msra.mxu0 0
  %559 = vmatprep.mubr.bf16.mxu0 0
  %560 = vmatmul.mubr.bf16.gmra.mrb[0].mxu0 %v525
  %v561 = vpop.f32.mrb[0].mxu0
  %v562 = vadd.f32 0.0, %v561
  %v563 = vpop.f32.mrb[0].mxu0
  %v564 = vadd.f32 0.0, %v563
  %v565 = vpop.f32.mrb[0].mxu0
  %v566 = vpop.f32.mrb[0].mxu0
  %567 = vdwg.mxu0
  %s568 = scalar_lea.vmem %s0, 112
  %v569 = vld [vmem:[%s568] sm:$0xff]
  %v570 = vld [vmem:[%s568 + $0x8] sm:$0xff]
  %v571 = vadd.f32 %v569, %v562
  %v572 = vxor.u32 %v571, 2147483648
  %v573 = vmul.f32 %v572, 1.442695
  %v574 = vpow.pop %v573
  %v575 = vadd.f32 %v574, 1.0
  %v576 = vrcp.pop %v575
  %v577 = vmul.f32 1.0, %v576
  %v578 = vadd.f32 %v564, %v40
  %v579 = vmul.f32 %v577, %v578
  %v580 = vadd.f32 %v570, %v579
  %v581 = vtanh.pop %v580
  %v582 = vsub.f32 1.0, %v577
  %584 = vrot.lane.b32.xlu0 %v581, 64
  %v585 = vpop.permute.xlu0 %584
  %v587 = vmul.f32 %v582, %v585
  %v588 = vmul.f32 %v577, %v519
  %v589 = vadd.f32 %v587, %v588
  %v590 = vpack.c.bf16 %v589, %v589
  %v591 = vld [vmem:[%s3] sm:$0xf]
  %v592 = vld [vmem:[%s3 + $0x4] sm:$0xf]
  %v593 = vld [vmem:[%s3 + $0x8] sm:$0xf]
  %v594 = vld [vmem:[%s3 + $0xc] sm:$0xf]
  %v595 = vld [vmem:[%s3 + $0x10] sm:$0xf]
  %v596 = vld [vmem:[%s3 + $0x14] sm:$0xf]
  %v597 = vld [vmem:[%s3 + $0x18] sm:$0xf]
  %v598 = vld [vmem:[%s3 + $0x1c] sm:$0xf]
  %v599 = vld [vmem:[%s4] sm:$0x1]
  %v601 = vlaneseq
  %v602 = vshrl.u32 %v601, 7
  %v603 = vsub.s32 0, %v602
  %v604 = vrot.slane %v599, %v603
  %607 = vrot.lane.b32.xlu0 %v590, 64
  %v608 = vpop.permute.xlu0 %607
  %v617 = vunpack.c.l.b16 %v591
  %v618 = vunpack.c.l.b16 %v592
  %v619 = vunpack.c.l.b16 %v593
  %v620 = vunpack.c.l.b16 %v594
  %v621 = vunpack.c.l.b16 %v595
  %v622 = vunpack.c.l.b16 %v596
  %v623 = vunpack.c.l.b16 %v597
  %v624 = vunpack.c.l.b16 %v598
  %v625 = vpack.c.b16 %v618, %v617
  %v626 = vpack.c.b16 %v620, %v619
  %v627 = vpack.c.b16 %v622, %v621
  %v628 = vpack.c.b16 %v624, %v623
  %v634 = vsel %vm103, %v608, 0
  %636 = vmatprep.subr.bf16.mxu0 0
  %637 = vmatpush1.bf16.msra.mxu0 %v625
  %638 = vmatprep.subr.bf16.mxu0 0
  %639 = vmatpush1.bf16.msra.mxu0 %v626
  %640 = vmatprep.subr.bf16.mxu0 0
  %641 = vmatpush1.bf16.msra.mxu0 %v627
  %642 = vmatprep.subr.bf16.mxu0 0
  %643 = vmatpush1.bf16.msra.mxu0 %v628
  %644 = vmatprep.subr.bf16.mxu0 0
  %645 = vmatpush1.bf16.msra.mxu0 0
  %646 = vmatprep.subr.bf16.mxu0 0
  %647 = vmatpush1.bf16.msra.mxu0 0
  %648 = vmatprep.subr.bf16.mxu0 0
  %649 = vmatpush1.bf16.msra.mxu0 0
  %650 = vmatprep.subr.bf16.mxu0 0
  %651 = vmatpush1.bf16.msra.mxu0 0
  %652 = vmatprep.subr.bf16.mxu0 0
  %653 = vmatpush1.bf16.msra.mxu0 0
  %654 = vmatprep.subr.bf16.mxu0 0
  %655 = vmatpush1.bf16.msra.mxu0 0
  %656 = vmatprep.subr.bf16.mxu0 0
  %657 = vmatpush1.bf16.msra.mxu0 0
  %658 = vmatprep.subr.bf16.mxu0 0
  %659 = vmatpush1.bf16.msra.mxu0 0
  %660 = vmatprep.subr.bf16.mxu0 0
  %661 = vmatpush1.bf16.msra.mxu0 0
  %662 = vmatprep.subr.bf16.mxu0 0
  %663 = vmatpush1.bf16.msra.mxu0 0
  %664 = vmatprep.subr.bf16.mxu0 0
  %665 = vmatpush1.bf16.msra.mxu0 0
  %666 = vmatprep.subr.bf16.mxu0 0
  %667 = vmatpush1.bf16.msra.mxu0 0
  %668 = vmatprep.mubr.bf16.mxu0 0
  %669 = vmatmul.mubr.bf16.gmra.mrb[0].mxu0 %v634
  %v670 = vpop.f32.mrb[0].mxu0
  %v671 = vadd.f32 %v604, %v670
  %v672 = vpop.f32.mrb[0].mxu0
  %v673 = vpop.f32.mrb[0].mxu0
  %v674 = vpop.f32.mrb[0].mxu0
  %675 = vdwg.mxu0
  %v676 = vmax.f32 %v671, 0.0
  %v677 = vpack.c.bf16 %v676, %v676
  %v678 = vld [vmem:[%s5] sm:$0xf]
  %v679 = vld [vmem:[%s5 + $0x4] sm:$0xf]
  %v680 = vld [vmem:[%s5 + $0x8] sm:$0xf]
  %v681 = vld [vmem:[%s5 + $0xc] sm:$0xf]
  %v682 = vld [vmem:[%s5 + $0x10] sm:$0xf]
  %v683 = vld [vmem:[%s5 + $0x14] sm:$0xf]
  %v684 = vld [vmem:[%s5 + $0x18] sm:$0xf]
  %v685 = vld [vmem:[%s5 + $0x1c] sm:$0xf]
  %v686 = vld [vmem:[%s5 + $0x20] sm:$0xf]
  %v687 = vld [vmem:[%s5 + $0x24] sm:$0xf]
  %v688 = vld [vmem:[%s5 + $0x28] sm:$0xf]
  %v689 = vld [vmem:[%s5 + $0x2c] sm:$0xf]
  %v690 = vld [vmem:[%s5 + $0x30] sm:$0xf]
  %v691 = vld [vmem:[%s5 + $0x34] sm:$0xf]
  %v692 = vld [vmem:[%s5 + $0x38] sm:$0xf]
  %v693 = vld [vmem:[%s5 + $0x3c] sm:$0xf]
  %v694 = vld [vmem:[%s6] sm:$0x1]
  %v696 = vlaneseq
  %v697 = vshrl.u32 %v696, 7
  %v698 = vsub.s32 0, %v697
  %v699 = vrot.slane %v694, %v698
  %v717 = vunpack.c.l.b16 %v678
  %v718 = vunpack.c.l.b16 %v679
  %v719 = vunpack.c.l.b16 %v680
  %v720 = vunpack.c.l.b16 %v681
  %v721 = vunpack.c.l.b16 %v682
  %v722 = vunpack.c.l.b16 %v683
  %v723 = vunpack.c.l.b16 %v684
  %v724 = vunpack.c.l.b16 %v685
  %v725 = vunpack.c.l.b16 %v686
  %v726 = vunpack.c.l.b16 %v687
  %v727 = vunpack.c.l.b16 %v688
  %v728 = vunpack.c.l.b16 %v689
  %v729 = vunpack.c.l.b16 %v690
  %v730 = vunpack.c.l.b16 %v691
  %v731 = vunpack.c.l.b16 %v692
  %v732 = vunpack.c.l.b16 %v693
  %v733 = vpack.c.b16 %v718, %v717
  %v734 = vpack.c.b16 %v720, %v719
  %v735 = vpack.c.b16 %v722, %v721
  %v736 = vpack.c.b16 %v724, %v723
  %v737 = vpack.c.b16 %v726, %v725
  %v738 = vpack.c.b16 %v728, %v727
  %v739 = vpack.c.b16 %v730, %v729
  %v740 = vpack.c.b16 %v732, %v731
  %749 = vmatprep.subr.bf16.mxu0 0
  %750 = vmatpush1.bf16.msra.mxu0 %v733
  %751 = vmatprep.subr.bf16.mxu0 0
  %752 = vmatpush1.bf16.msra.mxu0 %v734
  %753 = vmatprep.subr.bf16.mxu0 0
  %754 = vmatpush1.bf16.msra.mxu0 %v735
  %755 = vmatprep.subr.bf16.mxu0 0
  %756 = vmatpush1.bf16.msra.mxu0 %v736
  %757 = vmatprep.subr.bf16.mxu0 0
  %758 = vmatpush1.bf16.msra.mxu0 %v737
  %759 = vmatprep.subr.bf16.mxu0 0
  %760 = vmatpush1.bf16.msra.mxu0 %v738
  %761 = vmatprep.subr.bf16.mxu0 0
  %762 = vmatpush1.bf16.msra.mxu0 %v739
  %763 = vmatprep.subr.bf16.mxu0 0
  %764 = vmatpush1.bf16.msra.mxu0 %v740
  %765 = vmatprep.subr.bf16.mxu0 0
  %766 = vmatpush1.bf16.msra.mxu0 0
  %767 = vmatprep.subr.bf16.mxu0 0
  %768 = vmatpush1.bf16.msra.mxu0 0
  %769 = vmatprep.subr.bf16.mxu0 0
  %770 = vmatpush1.bf16.msra.mxu0 0
  %771 = vmatprep.subr.bf16.mxu0 0
  %772 = vmatpush1.bf16.msra.mxu0 0
  %773 = vmatprep.subr.bf16.mxu0 0
  %774 = vmatpush1.bf16.msra.mxu0 0
  %775 = vmatprep.subr.bf16.mxu0 0
  %776 = vmatpush1.bf16.msra.mxu0 0
  %777 = vmatprep.subr.bf16.mxu0 0
  %778 = vmatpush1.bf16.msra.mxu0 0
  %779 = vmatprep.subr.bf16.mxu0 0
  %780 = vmatpush1.bf16.msra.mxu0 0
  %781 = vmatprep.mubr.bf16.mxu0 0
  %782 = vmatmul.mubr.bf16.gmra.mrb[0].mxu0 %v677
  %v783 = vpop.f32.mrb[0].mxu0
  %v784 = vadd.f32 %v699, %v783
  %v785 = vpop.f32.mrb[0].mxu0
  %v786 = vpop.f32.mrb[0].mxu0
  %v787 = vpop.f32.mrb[0].mxu0
  %788 = vdwg.mxu0
  %789 = vst [vmem:[%s7] sm:$0xff] %v784
  // Predicated region
  $region30: #{gru_classifier_forward.1} parent=0 // pred_check
    _
  $region31: #{gru_classifier_forward.1} parent=0 // pred_check_branch
    %791 = sbr.rel (0) target = $region33
  $region32: #{gru_classifier_forward.1} parent=0 // pred_region
    _
  $region33: #{gru_classifier_forward.1} parent=0 // pred_fallthru
    _
  // Predicated region
  $region34: #{gru_classifier_forward.1} parent=0 // pred_check
    _
  $region35: #{gru_classifier_forward.1} parent=0 // pred_check_branch
    %793 = sbr.rel (0) target = $region37
  $region36: #{gru_classifier_forward.1} parent=0 // pred_region
    _
  $region37: #{gru_classifier_forward.1} parent=0 // pred_fallthru
    _

</llo_original>
